<compile_context>
chip_gen: v7x
topology: tpu7x:2x2x1
jax: 0.10.0
libtpu: 0.0.40
codegen_flags: <defaults>
</compile_context>

<pallas_src>
import jax
import jax.numpy as jnp
from jax.experimental import pallas as pl
from jax.experimental.pallas import tpu as pltpu

_PER_BUFFER_VMEM_BYTES = 4 * 1024 * 1024   # ~4 MiB per buffer -> ~16 MiB double-buffered
_VMEM_LIMIT_BYTES = 32 * 1024 * 1024       # safe on v5e/v6e/v7x, above v5e's 16 MiB default
_MAX_LANE_TILE = 8192                      # hard cap on lane tile width (32 KiB/row @ f32)


def _round_down(x: int, m: int) -> int:
    return (x // m) * m


def _chomp_kernel(x_ref, o_ref):
    # Works for both tiled layouts:
    #  * lane-tiled path: x_ref and o_ref have identical widths -> plain tile copy.
    #  * full-L path: x_ref carries the full L lanes; slice off the chomped tail
    #    in VMEM so the output store is lane-dense and unmasked.
    o_ref[...] = x_ref[:, : o_ref.shape[-1]]


def chomp1d(x: jax.Array, chomp_size: int) -> jax.Array:
    """x: (N, C, L) -> (N, C, L - chomp_size), same dtype."""
    n, c, l = x.shape

    if chomp_size == 0:
        # PyTorch's literal `x[:, :, :-0]` is a degenerate empty slice; the
        # intended semantics of chomp_size == 0 is "no chomp", so pass through.
        return x
    if not (0 < chomp_size < l):
        raise ValueError(f"chomp_size must be in (0, L); got {chomp_size}, L={l}")

    l_out = l - chomp_size
    itemsize = jnp.dtype(x.dtype).itemsize
    rows = n * c
    # Sublane packing: 8 for 32-bit, 16 for bf16, 32 for int8/fp8.
    pack = max(8, 32 // max(itemsize, 1))

    if l_out < 128:
        # Lane width < 128 would force masked partial stores and a standalone
        # pallas_call whose launch overhead dwarfs the tiny copy; a plain XLA
        # slice fuses with neighbors and is strictly faster here.
        return x[:, :, :l_out]

    x2d = x.reshape(rows, l)  # free view for a contiguous NCL array
    budget_elems = _PER_BUFFER_VMEM_BYTES // itemsize

    use_full_l = (
        l_out % 128 != 0              # lane-tiled path would mask the final lane block
        and chomp_size * 10 <= l      # tail read overhead < ~10% of traffic
        and pack * l <= budget_elems  # at least `pack` full-L rows fit the budget
    )

    if use_full_l:
        # ---- Full-L rows: contiguous input DMAs, unmasked lane-dense output ----
        tr = max(pack, _round_down(budget_elems // l, pack))
        if tr >= rows:
            tr = rows
        # Keep >= 2 grid steps so v7x can shard across its 2 TensorCores.
        if tr == rows and rows >= 2 * pack:
            tr = max(pack, _round_down(rows // 2, pack))
        grid = (pl.cdiv(rows, tr),)
        in_specs = [pl.BlockSpec((tr, l), lambda r: (r, 0))]
        out_spec = pl.BlockSpec((tr, l_out), lambda r: (r, 0))
        dims = ("parallel",)
        read_bytes = rows * l * itemsize
    else:
        # ---- Lane-tiled: never DMA the chomped tail (except masked last block) ----
        tl_full = _round_down(l_out, 128)                       # >= 128 here
        tl_budget = _round_down(budget_elems // pack, 128)      # widest tile at min rows
        tl_cap = max(128, min(tl_full, tl_budget, _MAX_LANE_TILE))
        # Prefer a lane tile that divides l_out exactly (no masked final block),
        # but don't shrink below ~max(512, cap/4) just to get divisibility.
        tl = tl_cap
        min_tl = max(512, tl_cap // 4)
        cand = tl_cap
        while cand >= 128 and cand >= min_tl:
            if l_out % cand == 0:
                tl = cand
                break
            cand -= 128

        tr = max(pack, _round_down(budget_elems // tl, pack))
        if tr >= rows:
            tr = rows
        lane_blocks = pl.cdiv(l_out, tl)
        row_blocks = pl.cdiv(rows, tr)
        # Keep >= 2 total grid steps so v7x can shard across its 2 TensorCores.
        if lane_blocks * row_blocks == 1 and rows >= 2 * pack:
            tr = max(pack, _round_down(rows // 2, pack))
            row_blocks = pl.cdiv(rows, tr)
        grid = (row_blocks, lane_blocks)
        in_specs = [pl.BlockSpec((tr, tl), lambda r, li: (r, li))]
        out_spec = pl.BlockSpec((tr, tl), lambda r, li: (r, li))
        dims = ("parallel", "parallel")
        read_bytes = rows * l_out * itemsize

    cost = pl.CostEstimate(
        flops=0,
        transcendentals=0,
        bytes_accessed=read_bytes + rows * l_out * itemsize,
    )

    out2d = pl.pallas_call(
        _chomp_kernel,
        out_shape=jax.ShapeDtypeStruct((rows, l_out), x.dtype),
        grid_spec=pltpu.PrefetchScalarGridSpec(
            num_scalar_prefetch=0,
            grid=grid,
            in_specs=in_specs,
            out_specs=out_spec,
        ),
        compiler_params=pltpu.CompilerParams(
            dimension_semantics=dims,
            vmem_limit_bytes=_VMEM_LIMIT_BYTES,
        ),
        cost_estimate=cost,
    )(x2d)
    return out2d.reshape(n, c, l_out)


if __name__ == "__main__":
    key = jax.random.PRNGKey(0)
    k1, k2, k3, k4 = jax.random.split(key, 4)

    # Case 1: tiny module-scale shapes (N=2, C=4, L=16, chomp=3) — XLA-slice path.
    x1 = jax.random.normal(k1, (2, 4, 16), dtype=jnp.float32)
    o1 = jax.block_until_ready(chomp1d(x1, 3))
    assert o1.shape == (2, 4, 13) and o1.dtype == x1.dtype
    assert jnp.array_equal(o1, x1[:, :, :-3])

    # chomp_size == 0 -> intended no-op passthrough.
    o0 = jax.block_until_ready(chomp1d(x1, 0))
    assert jnp.array_equal(o0, x1)

    # Case 2: lane-tiled Pallas path (l_out = 512, multiple of 128, 2-step grid).
    x2 = jax.random.normal(k2, (2, 16, 515), dtype=jnp.float32)
    o2 = jax.block_until_ready(chomp1d(x2, 3))
    assert o2.shape == (2, 16, 512) and o2.dtype == x2.dtype
    assert jnp.array_equal(o2, x2[:, :, :-3])

    # Case 3: full-L-row Pallas path (l_out = 633, small chomp fraction).
    x3 = jax.random.normal(k3, (2, 16, 640), dtype=jnp.float32)
    o3 = jax.block_until_ready(chomp1d(x3, 7))
    assert o3.shape == (2, 16, 633) and o3.dtype == x3.dtype
    assert jnp.array_equal(o3, x3[:, :, :-7])

    # Case 4: lane-tiled path with a masked partial final lane block
    #         (large chomp fraction, l_out = 140).
    x4 = jax.random.normal(k4, (2, 8, 300), dtype=jnp.float32)
    o4 = jax.block_until_ready(chomp1d(x4, 160))
    assert o4.shape == (2, 8, 140) and o4.dtype == x4.dtype
    assert jnp.array_equal(o4, x4[:, :, :-160])

    print("KERNEL_OK")
</pallas_src>

<mosaic_0001>
module attributes {stable_mosaic.version = 11 : i64} {
  func.func @_chomp_kernel(%arg0: i32, %arg1: i32, %arg2: memref<16x512xf32, #tpu.memory_space<vmem>>, %arg3: memref<16x512xf32, #tpu.memory_space<vmem>>) attributes {dimension_semantics = [#tpu.dimension_semantics<parallel>, #tpu.dimension_semantics<parallel>], iteration_bounds = array<i64: 2, 1>, scalar_prefetch = 0 : i64, scratch_operands = 0 : i64, tpu.core_type = #tpu.core_type<tc>, window_params = [{transform_indices = @transform_0, window_bounds = array<i64: 16, 512>}, {transform_indices = @transform_1, window_bounds = array<i64: 16, 512>}]} {
    %c0 = arith.constant 0 : index
    %c0_0 = arith.constant 0 : index
    %0 = vector.load %arg2[%c0, %c0_0] : memref<16x512xf32, #tpu.memory_space<vmem>>, vector<16x512xf32>
    %c0_1 = arith.constant 0 : index
    %c0_2 = arith.constant 0 : index
    %1 = vector.load %arg3[%c0_1, %c0_2] : memref<16x512xf32, #tpu.memory_space<vmem>>, vector<16x512xf32>
    tpu.vector_store %arg3[%c0_1, %c0_2], %0 {strides = array<i32>} : memref<16x512xf32, #tpu.memory_space<vmem>>, vector<16x512xf32>,
    return
  }
  func.func @transform_0(%arg0: i32, %arg1: i32) -> (i32, i32) {
    %c0_i32 = arith.constant 0 : i32
    return %arg0, %arg1 : i32, i32
  }
  func.func @transform_1(%arg0: i32, %arg1: i32) -> (i32, i32) {
    %c0_i32 = arith.constant 0 : i32
    return %arg0, %arg1 : i32, i32
  }
}

</mosaic_0001>

<llo_original>
// kernel: tpu_custom_call.1
$region0: #{tpu_custom_call.1}
  #allocation0 [shape = 'u32[]', space=smem, size = 0x4, offset = 0x4, fixed_abs, tag = 'smem constant byte address 0x4 - core index']
  #allocation1 [shape = 'u32[144,128]{1,0:T(1,128)}', space=vmem, size = 0x12000, scoped, tag = 'internal scratch']
  %s0 = inlined_call_operand.hbm [shape: f32[32,515], index: 0, kind: input, shape index: {}]
  %s1 = inlined_call_operand.hbm [shape: f32[32,512], index: 1, kind: output, shape index: {}]
  %s2 = sld [smem:[#allocation0]]
  $region41: #{tpu_custom_call.1} parent=0
    _
  %s4 = ssub.s32 1, %s2
  %s5 = scalar_select 0, %s4, %s2
  $region1: #{tpu_custom_call.1} parent=0
    #allocation2 [shape = 'u8[65536]{0}', space=vmem, size = 0x10000, scoped, tag = 'input window, operand 0']
    #allocation3 [shape = 's32[2]{0}', space=sflag, size = 0x8, scoped, tag = 'scoped memory for tpu_custom_call.1']
    #allocation4 [shape = 's32[2]{0}', space=sflag, size = 0x8, scoped, tag = 'scoped memory for tpu_custom_call.1']
    #allocation5 [shape = 'u8[65536]{0}', space=vmem, size = 0x10000, scoped, tag = 'output window, operand 0']
    %6 = vsyncpa [#allocation3], 0
    %s7 = scalar_lea.sflag [#allocation3], 1
    %8 = vsyncpa %s7, 0
    %9 = vsyncpa [#allocation4], 0
    %s10 = scalar_lea.sflag [#allocation4], 1
    %11 = vsyncpa %s10, 0
    loop: start=0, step=1, limit=4
    $region2: #{tpu_custom_call.1} parent=1 // loop_pre_header
      _
    $region3: #{tpu_custom_call.1} parent=1 // loop_header
      %s13 = sphi 0, %s17
      %p14 = scmp.ge.s32.totalorder %s13, 4
      %s20 = sphi 0, %s32
      %s21 = sphi 0, %s28
      %s22 = sphi 0, %s20
      %s23 = sphi 0, %s21
      %s24 = sphi 0, %s22
      %s25 = sphi 0, %s23
      %s37 = sphi 0, %s39
      %s40 = sphi 0, %s37
      %s41 = sphi 0, %s40
      %s57 = sphi 0, %s41
      %s65 = sphi 0, %s67
      %s68 = sphi 0, %s65
      %s69 = sphi 0, %s68
      %s85 = sphi 0, %s69
    $region4: #{tpu_custom_call.1} parent=1 // loop_header_branch
      %16 = sbr.rel (%p14) target = $region8
    $region5: #{tpu_custom_call.1} parent=1 // loop_body
      %s18 = ssub.s32 %s13, 1
      %s19 = ssub.s32 %s13, 2
      %s26 = sadd.s32 1, %s21
      %p27 = scmp.ge.s32.totalorder %s26, 1
      %s28 = scalar_select %p27, 0, %s26
      %s29 = sadd.s32 1, %s20
      %s30 = scalar_select %p27, %s29, %s20
      %p31 = scmp.ge.s32.totalorder %s30, 2
      %s32 = scalar_select %p31, 0, %s30
      %s33 = ssub.s32 %s20, %s32
      %s34 = ssub.s32 %s21, %s28
      %s35 = sor.u32 %s33, %s34
      %p36 = scmp.eq.s32.totalorder %s35, 0
      %s38 = sadd.s32 %s37, 1
      %s39 = scalar_select %p36, %s37, %s38
      %p42 = pneg %p36
      %p43 = scmp.eq.s32.totalorder %s13, 1
      %p44 = por %p42, %p43
      %p45 = scmp.ne.s32.totalorder %s37, %s40
      %p46 = scmp.eq.s32.totalorder %s13, 0
      %p47 = por %p45, %p46
      %p48 = scmp.ne.s32.totalorder %s37, %s40
      %p49 = scmp.eq.s32.totalorder %s18, 1
      %p50 = por %p48, %p49
      %p51 = scmp.ne.s32.totalorder %s40, %s41
      %p52 = scmp.eq.s32.totalorder %s18, 0
      %p53 = por %p51, %p52
      %p54 = scmp.ne.s32.totalorder %s40, %s41
      %p55 = scmp.eq.s32.totalorder %s19, 1
      %p56 = por %p54, %p55
      %p58 = scmp.ne.s32.totalorder %s41, %s57
      %p59 = scmp.eq.s32.totalorder %s19, 0
      %p60 = por %p58, %p59
      %s61 = ssub.s32 %s20, %s32
      %s62 = ssub.s32 %s21, %s28
      %s63 = sor.u32 %s61, %s62
      %p64 = scmp.eq.s32.totalorder %s63, 0
      %s66 = sadd.s32 %s65, 1
      %s67 = scalar_select %p64, %s65, %s66
      %p70 = pneg %p64
      %p71 = scmp.eq.s32.totalorder %s13, 1
      %p72 = por %p70, %p71
      %p73 = scmp.ne.s32.totalorder %s65, %s68
      %p74 = scmp.eq.s32.totalorder %s13, 0
      %p75 = por %p73, %p74
      %p76 = scmp.ne.s32.totalorder %s65, %s68
      %p77 = scmp.eq.s32.totalorder %s18, 1
      %p78 = por %p76, %p77
      %p79 = scmp.ne.s32.totalorder %s68, %s69
      %p80 = scmp.eq.s32.totalorder %s18, 0
      %p81 = por %p79, %p80
      %p82 = scmp.ne.s32.totalorder %s68, %s69
      %p83 = scmp.eq.s32.totalorder %s19, 1
      %p84 = por %p82, %p83
      %p86 = scmp.ne.s32.totalorder %s69, %s85
      %p87 = scmp.eq.s32.totalorder %s19, 0
      %p88 = por %p86, %p87
      %p89 = scmp.le.s32.totalorder 1, %s13
      %p90 = scmp.lt.s32.totalorder %s13, 3
      %p91 = pnand %p89, %p90
      %p92 = pneg %p91
      // Predicated region
      $region9: #{tpu_custom_call.1} parent=5 // pred_check
        _
      $region10: #{tpu_custom_call.1} parent=5 // pred_check_branch
        %94 = sbr.rel (%p91) target = $region12
      $region11: #{tpu_custom_call.1} parent=5 // pred_region
        %s95 = ssub.s32 %s13, 1
      $region12: #{tpu_custom_call.1} parent=5 // pred_fallthru
        _
      %p96 = scmp.lt.s32.totalorder %s13, 2
      // Predicated region
      $region13: #{tpu_custom_call.1} parent=5 // pred_check
        %p97 = pneg %p96
      $region14: #{tpu_custom_call.1} parent=5 // pred_check_branch
        %99 = sbr.rel (%p97) target = $region16
      $region15: #{tpu_custom_call.1} parent=5 // pred_region
        // Predicated region
        $region17: #{tpu_custom_call.1} parent=15 // pred_check
          %p100 = pneg %p47
        $region18: #{tpu_custom_call.1} parent=15 // pred_check_branch
          %102 = sbr.rel (%p100) target = $region20
        $region19: #{tpu_custom_call.1} parent=15 // pred_region
          %s103 = sand.u32 %s37, 1
          %s104 = scalar_lea.sflag [#allocation3], %s103
          %s105 = sand.u32 %s37, 1
          %s106 = smul.addr %s105, 64
          %s107 = scalar_lea.vmem [#allocation2], %s106
          %s108 = smul.u32 2, %s20
          %s109 = smul.u32 4, %s21
          %s110 = ssub.s32 5, %s109
          %p111 = scmp.lt.s32.totalorder %s110, 4
          %s112 = scalar_select %p111, %s110, 4
          %s113 = smul.u32 256, %s112
          %s115 = ssub.s32 1024, %s113
          %116 = vsyncadd %s104, %s115
          %p117 = scmp.ne.s32.totalorder 0, %s113
          %s118 = smul.addr %s108, 5
          %s119 = sadd.s32 %s109, %s118
          %s120 = smul.addr %s119, 128
          %s121 = scalar_lea.hbm %s0, %s120
          %s122 = smul.u32 %s112, 8
          %s123 = smul.u32 %s122, 2
          %s124 = sshll.u32 %s107, 4
          %s125 = int_to_ptr.vmem [resolvable:$true] %s124
          %s126 = sshll.u32 %s123, 4
          %130 = dma.hbm_to_vmem [thread:$0]  (%p117), %s121, %s126, %s125, %s104, 640, 512, %s122
        $region20: #{tpu_custom_call.1} parent=15 // pred_fallthru
          _
      $region16: #{tpu_custom_call.1} parent=5 // pred_fallthru
        _
      %p131 = scmp.le.s32.totalorder 1, %s13
      %p132 = scmp.lt.s32.totalorder %s13, 3
      %p133 = pnand %p131, %p132
      %p134 = pneg %p133
      // Predicated region
      $region21: #{tpu_custom_call.1} parent=5 // pred_check
        _
      $region22: #{tpu_custom_call.1} parent=5 // pred_check_branch
        %136 = sbr.rel (%p133) target = $region24
      $region23: #{tpu_custom_call.1} parent=5 // pred_region
        %s137 = ssub.s32 %s13, 1
        %s138 = sand.u32 %s40, 1
        %s139 = scalar_lea.sflag [#allocation3], %s138
        %s140 = sand.u32 %s40, 1
        %s141 = smul.addr %s140, 64
        %s142 = scalar_lea.vmem [#allocation2], %s141
        // Predicated region
        $region25: #{tpu_custom_call.1} parent=23 // pred_check
          %p143 = pneg %p53
        $region26: #{tpu_custom_call.1} parent=23 // pred_check_branch
          %145 = sbr.rel (%p143) target = $region28
        $region27: #{tpu_custom_call.1} parent=23 // pred_region
          %146 = dma.done %s139, 1024
        $region28: #{tpu_custom_call.1} parent=23 // pred_fallthru
          _
        %s147 = sand.u32 %s40, 1
        %s148 = scalar_lea.sflag [#allocation3], %s147
        %s149 = sand.u32 %s40, 1
        %s150 = smul.addr %s149, 64
        %s151 = scalar_lea.vmem [#allocation2], %s150
        %p152 = pneg %p53
        %p153 = pneg %p50
        %p154 = pneg %p81
        %p155 = pneg %p78
        %s156 = sand.u32 %s68, 1
        %s157 = scalar_lea.sflag [#allocation4], %s156
        %s158 = sand.u32 %s68, 1
        %s159 = smul.addr %s158, 64
        %s160 = scalar_lea.vmem [#allocation5], %s159
        %s161 = smul.u32 2, %s22
        %s162 = smul.u32 4, %s23
        %s163 = ssub.s32 5, %s162
        %p164 = scmp.lt.s32.totalorder %s163, 4
        %s165 = scalar_select %p164, %s163, 4
        %s166 = smul.u32 256, %s165
        %s167 = smul.u32 2, %s22
        %s168 = smul.u32 4, %s23
        %v169 = vld [vmem:[%s142] sm:$0xff]
        %v170 = vld [vmem:[%s142 + $0x8] sm:$0xff]
        %v171 = vld [vmem:[%s142 + $0x10] sm:$0xff]
        %v172 = vld [vmem:[%s142 + $0x18] sm:$0xff]
        %v173 = vld [vmem:[%s142 + $0x20] sm:$0xff]
        %v174 = vld [vmem:[%s142 + $0x28] sm:$0xff]
        %v175 = vld [vmem:[%s142 + $0x30] sm:$0xff]
        %v176 = vld [vmem:[%s142 + $0x38] sm:$0xff]
        %177 = vst [vmem:[%s160] sm:$0xff] %v169
        %178 = vst [vmem:[%s160 + $0x8] sm:$0xff] %v170
        %179 = vst [vmem:[%s160 + $0x10] sm:$0xff] %v171
        %180 = vst [vmem:[%s160 + $0x18] sm:$0xff] %v172
        %181 = vst [vmem:[%s160 + $0x20] sm:$0xff] %v173
        %182 = vst [vmem:[%s160 + $0x28] sm:$0xff] %v174
        %183 = vst [vmem:[%s160 + $0x30] sm:$0xff] %v175
        %184 = vst [vmem:[%s160 + $0x38] sm:$0xff] %v176
        %s185 = sand.u32 %s68, 1
        %s186 = scalar_lea.sflag [#allocation4], %s185
        %s187 = sand.u32 %s68, 1
        %s188 = smul.addr %s187, 64
        %s189 = scalar_lea.vmem [#allocation5], %s188
        // Predicated region
        $region29: #{tpu_custom_call.1} parent=23 // pred_check
          %p190 = pneg %p78
        $region30: #{tpu_custom_call.1} parent=23 // pred_check_branch
          %192 = sbr.rel (%p190) target = $region32
        $region31: #{tpu_custom_call.1} parent=23 // pred_region
          %s193 = smul.u32 2, %s22
          %s194 = smul.u32 4, %s23
          %s196 = ssub.s32 1024, 1024
          %197 = vsyncadd %s186, %s196
          %s198 = smul.addr %s193, 4
          %s199 = sadd.s32 %s194, %s198
          %s200 = smul.addr %s199, 128
          %s201 = scalar_lea.hbm %s1, %s200
          %s202 = sshll.u32 %s189, 4
          %s203 = int_to_ptr.vmem [resolvable:$true] %s202
          %208 = dma.vmem_to_hbm [thread:$0]  %s203, 1024, %s201, %s186, 512, 512, 32
        $region32: #{tpu_custom_call.1} parent=23 // pred_fallthru
          _
      $region24: #{tpu_custom_call.1} parent=5 // pred_fallthru
        _
      %p209 = scmp.le.s32.totalorder 2, %s13
      // Predicated region
      $region33: #{tpu_custom_call.1} parent=5 // pred_check
        %p210 = pneg %p209
      $region34: #{tpu_custom_call.1} parent=5 // pred_check_branch
        %212 = sbr.rel (%p210) target = $region36
      $region35: #{tpu_custom_call.1} parent=5 // pred_region
        %s213 = ssub.s32 %s13, 2
        // Predicated region
        $region37: #{tpu_custom_call.1} parent=35 // pred_check
          %p214 = pneg %p84
        $region38: #{tpu_custom_call.1} parent=35 // pred_check_branch
          %216 = sbr.rel (%p214) target = $region40
        $region39: #{tpu_custom_call.1} parent=35 // pred_region
          %s217 = sand.u32 %s69, 1
          %s218 = scalar_lea.sflag [#allocation4], %s217
          %s219 = sand.u32 %s69, 1
          %s220 = smul.addr %s219, 64
          %s221 = scalar_lea.vmem [#allocation5], %s220
          %222 = dma.done %s218, 1024
        $region40: #{tpu_custom_call.1} parent=35 // pred_fallthru
          _
      $region36: #{tpu_custom_call.1} parent=5 // pred_fallthru
        _
    $region6: #{tpu_custom_call.1} parent=1 // loop_footer
      %s17 = sadd.s32 1, %s13
    $region7: #{tpu_custom_call.1} parent=1 // loop_footer_branch
      %12 = sbr.rel target = $region3
    $region8: #{tpu_custom_call.1} parent=1 // loop_exit
      _
    %223 = vsyncpa [#allocation3], 1
    %s224 = scalar_lea.sflag [#allocation3], 1
    %225 = vsyncpa %s224, 1
    %226 = vsyncpa [#allocation4], 1
    %s227 = scalar_lea.sflag [#allocation4], 1
    %228 = vsyncpa %s227, 1

</llo_original>
